<compile_context>
chip_gen: v5e
topology: v5e:2x2
jax: 0.10.0
libtpu: 0.0.40
codegen_flags: <defaults>
</compile_context>

<pallas_src>
import functools

import jax
import jax.numpy as jnp
import numpy as np
from jax.experimental import pallas as pl
from jax.experimental.pallas import tpu as pltpu


def _round_up(x, m):
    return (x + m - 1) // m * m


# ----------------------------- kernels --------------------------------------


def _apply_act(y, act, a_ref):
    if act == "relu":
        return jnp.maximum(y, jnp.zeros_like(y))
    elif act == "prelu":
        a = a_ref[0]  # PReLU with a single learned parameter (PyTorch default)
        return jnp.where(y >= 0, y, a * y)
    else:
        raise ValueError(f"unknown activation {act!r}")


def _conv_matmul_kernel(a_ref, pT_ref, w_ref, b_ref, o_ref, *, act):
    # pT_ref: (K_pad, tm)   w_ref: (Cout_pad, K_pad)   b_ref: (Cout_pad, 1)
    # o_ref : (Cout_pad, tm)  -- lane axis = M tile (lane-dense stores).
    y = jnp.dot(w_ref[...], pT_ref[...], preferred_element_type=jnp.float32)
    y = y + b_ref[...]                      # (Cout_pad, tm) + (Cout_pad, 1)
    o_ref[...] = _apply_act(y, act, a_ref).astype(o_ref.dtype)


def _maxpool_kernel(a_ref, win_ref, o_ref, *, act):
    # win_ref: (9, tl) -- max over the 9 pooling taps (sublane reduction),
    # o_ref  : (1, tl) -- lane-dense store.
    y = jnp.max(win_ref[...], axis=0, keepdims=True)
    o_ref[...] = _apply_act(y, act, a_ref).astype(o_ref.dtype)


# ----------------------------- wrappers --------------------------------------


def conv2d_pallas(x, w, b, a_prelu, act, *, tm=256):
    """Conv2d(stride=1, padding=0) as a lane-dense, M-tiled matmul. NCHW."""
    N, Cin, H, W = x.shape
    Cout, _, KH, KW = w.shape
    OH, OW = H - KH + 1, W - KW + 1
    M, K = N * OH * OW, Cin * KH * KW

    # Transposed im2col: (K, M) with k-order (ci, kh, kw) and m-order (n, oh, ow).
    cols = []
    for kh in range(KH):
        for kw in range(KW):
            cols.append(x[:, :, kh:kh + OH, kw:kw + OW])      # (N, Cin, OH, OW)
    pT = jnp.stack(cols, axis=2)                              # (N, Cin, KH*KW, OH, OW)
    pT = pT.transpose(1, 2, 0, 3, 4).reshape(K, M)            # (K, M)

    K_pad = _round_up(K, 128)          # aligned contraction depth
    Cout_pad = _round_up(Cout, 8)      # sublane multiple
    M_pad = _round_up(M, tm)           # whole M tiles

    pT = jnp.pad(pT.astype(jnp.float32), ((0, K_pad - K), (0, M_pad - M)))
    w2 = jnp.pad(w.reshape(Cout, K).astype(jnp.float32),
                 ((0, Cout_pad - Cout), (0, K_pad - K)))       # (Cout_pad, K_pad)
    b2 = jnp.pad(b.astype(jnp.float32),
                 (0, Cout_pad - Cout)).reshape(Cout_pad, 1)    # (Cout_pad, 1)

    grid = (M_pad // tm,)
    out = pl.pallas_call(
        functools.partial(_conv_matmul_kernel, act=act),
        out_shape=jax.ShapeDtypeStruct((Cout_pad, M_pad), jnp.float32),
        grid=grid,
        in_specs=[
            pl.BlockSpec(memory_space=pltpu.MemorySpace.SMEM),        # prelu scalar
            pl.BlockSpec((K_pad, tm), lambda j: (0, j)),              # patches (tiled M)
            pl.BlockSpec((Cout_pad, K_pad), lambda j: (0, 0)),        # weight (resident)
            pl.BlockSpec((Cout_pad, 1), lambda j: (0, 0)),            # bias   (resident)
        ],
        out_specs=pl.BlockSpec((Cout_pad, tm), lambda j: (0, j)),
        compiler_params=pltpu.CompilerParams(
            dimension_semantics=("parallel",),
            # let XLA fuse the im2col producer into the kernel instead of
            # materialising the expanded patches in HBM
            allow_input_fusion=[False, True, False, False],
        ),
    )(a_prelu, pT, w2, b2)

    # un-pad and go back to NCHW (tiny output; transpose cost negligible here)
    out = out[:Cout, :M]
    return out.reshape(Cout, N, OH, OW).transpose(1, 0, 2, 3)


def maxpool2d_pallas(x, a_prelu, act, *, ksize=3, stride=3, tl=512):
    """MaxPool2d(3) (stride=3, no padding) with a lane-dense flat reduction."""
    N, C, H, W = x.shape
    OH = (H - ksize) // stride + 1
    OW = (W - ksize) // stride + 1
    L = N * C * OH * OW
    nt = ksize * ksize

    # For kernel == stride this is a permutation (no data amplification):
    # tap (kh, kw) -> flat (n, c, oh, ow) row-major.
    wins = []
    for kh in range(ksize):
        for kw in range(ksize):
            wins.append(x[:, :, kh::stride, kw::stride][:, :, :OH, :OW])
    windows = jnp.stack(wins, axis=0).astype(jnp.float32).reshape(nt, L)

    L_pad = _round_up(L, tl)
    windows = jnp.pad(windows, ((0, 0), (0, L_pad - L)))

    out = pl.pallas_call(
        functools.partial(_maxpool_kernel, act=act),
        out_shape=jax.ShapeDtypeStruct((1, L_pad), jnp.float32),
        grid=(L_pad // tl,),
        in_specs=[
            pl.BlockSpec(memory_space=pltpu.MemorySpace.SMEM),        # prelu scalar
            pl.BlockSpec((nt, tl), lambda i: (0, i)),                 # taps (lane tiles)
        ],
        out_specs=pl.BlockSpec((1, tl), lambda i: (0, i)),
        compiler_params=pltpu.CompilerParams(dimension_semantics=("parallel",)),
    )(a_prelu, windows)

    return out[0, :L].reshape(N, C, OH, OW)


# ----------------------------- module ----------------------------------------


class ModuleDictPallas:
    """Pallas equivalent of the PyTorch ModuleDict module."""

    def __init__(self, key):
        k_w, k_b = jax.random.split(key)
        fan_in = 10 * 3 * 3
        bound = 1.0 / np.sqrt(fan_in)
        # Conv2d(10, 10, 3) parameters (deterministic, kaiming-uniform-like)
        self.conv_w = jax.random.uniform(k_w, (10, 10, 3, 3), jnp.float32,
                                         minval=-bound, maxval=bound)
        self.conv_b = jax.random.uniform(k_b, (10,), jnp.float32,
                                         minval=-bound, maxval=bound)
        # PReLU (num_parameters=1) default init
        self.prelu_a = jnp.array([0.25], dtype=jnp.float32)

    def __call__(self, x, choice, act):
        if choice == "conv":
            y = conv2d_pallas(x, self.conv_w, self.conv_b, self.prelu_a, act)
        elif choice == "pool":
            y = maxpool2d_pallas(x, self.prelu_a, act)
        else:
            raise KeyError(choice)
        return y


# ----------------------------- reference (plain JAX) --------------------------


def _reference(x, choice, act, conv_w, conv_b, prelu_a):
    if choice == "conv":
        y = jax.lax.conv_general_dilated(
            x, conv_w, (1, 1), "VALID",
            dimension_numbers=("NCHW", "OIHW", "NCHW"))
        y = y + conv_b[None, :, None, None]
    else:
        y = jax.lax.reduce_window(
            x, -jnp.inf, jax.lax.max,
            window_dimensions=(1, 1, 3, 3),
            window_strides=(1, 1, 3, 3),
            padding="VALID")
    if act == "relu":
        y = jnp.maximum(y, 0.0)
    else:
        y = jnp.where(y >= 0, y, prelu_a[0] * y)
    return y


# ----------------------------- main -------------------------------------------


if __name__ == "__main__":
    key = jax.random.PRNGKey(0)
    k_param, k_x = jax.random.split(key)

    module = ModuleDictPallas(k_param)

    # input: NCHW; Conv2d expects 10 input channels
    x = jax.random.normal(k_x, (2, 10, 16, 16), dtype=jnp.float32)

    for choice in ("conv", "pool"):
        for act in ("relu", "prelu"):
            y = module(x, choice, act)
            y = jax.block_until_ready(y)
            y_ref = _reference(x, choice, act, module.conv_w, module.conv_b,
                               module.prelu_a)
            np.testing.assert_allclose(np.asarray(y), np.asarray(y_ref),
                                       rtol=1e-3, atol=1e-3)

    print("KERNEL_OK")
</pallas_src>

<mosaic_0001>
module attributes {stable_mosaic.version = 11 : i64} {
  func.func @_conv_matmul_kernel(%arg0: i32, %arg1: memref<1xf32, #tpu.memory_space<smem>>, %arg2: memref<128x256xf32, #tpu.memory_space<vmem>>, %arg3: memref<16x128xf32, #tpu.memory_space<vmem>>, %arg4: memref<16x1xf32, #tpu.memory_space<vmem>>, %arg5: memref<16x256xf32, #tpu.memory_space<vmem>>) attributes {dimension_semantics = [#tpu.dimension_semantics<parallel>], iteration_bounds = array<i64: 2>, scalar_prefetch = 0 : i64, scratch_operands = 0 : i64, tpu.core_type = #tpu.core_type<tc>, window_params = [{transform_indices = @transform_0, window_bounds = array<i64: 1>}, {transform_indices = @transform_1, window_bounds = array<i64: 128, 256>}, {pipeline_mode = #tpu.pipeline_mode<synchronous>, transform_indices = @transform_2, window_bounds = array<i64: 16, 128>}, {pipeline_mode = #tpu.pipeline_mode<synchronous>, transform_indices = @transform_3, window_bounds = array<i64: 16, 1>}, {transform_indices = @transform_4, window_bounds = array<i64: 16, 256>}]} {
    %c0 = arith.constant 0 : index
    %c0_0 = arith.constant 0 : index
    %0 = vector.load %arg3[%c0, %c0_0] : memref<16x128xf32, #tpu.memory_space<vmem>>, vector<16x128xf32>
    %c0_1 = arith.constant 0 : index
    %c0_2 = arith.constant 0 : index
    %1 = vector.load %arg2[%c0_1, %c0_2] : memref<128x256xf32, #tpu.memory_space<vmem>>, vector<128x256xf32>
    %cst = arith.constant dense<0.000000e+00> : vector<16x256xf32>
    %2 = tpu.matmul %0, %1, %cst {dimension_numbers = #tpu.dot_dimension_numbers<[1], [0], [0], [1], [0, 0, 1, 1], [], []>} : vector<16x128xf32>, vector<128x256xf32>, vector<16x256xf32> -> vector<16x256xf32>
    %c0_3 = arith.constant 0 : index
    %c0_4 = arith.constant 0 : index
    %3 = vector.load %arg4[%c0_3, %c0_4] : memref<16x1xf32, #tpu.memory_space<vmem>>, vector<16x1xf32>
    %4 = vector.broadcast %3 : vector<16x1xf32> to vector<16x256xf32>
    %5 = arith.addf %2, %4 : vector<16x256xf32>
    %cst_5 = arith.constant 0.000000e+00 : f32
    %6 = vector.broadcast %cst_5 : f32 to vector<16x256xf32>
    %7 = arith.maximumf %5, %6 : vector<16x256xf32>
    %c0_6 = arith.constant 0 : index
    %c0_7 = arith.constant 0 : index
    %8 = vector.load %arg5[%c0_6, %c0_7] : memref<16x256xf32, #tpu.memory_space<vmem>>, vector<16x256xf32>
    tpu.vector_store %arg5[%c0_6, %c0_7], %7 {strides = array<i32>} : memref<16x256xf32, #tpu.memory_space<vmem>>, vector<16x256xf32>,
    return
  }
  func.func @transform_0(%arg0: i32) -> i32 {
    %c0_i32 = arith.constant 0 : i32
    %c0_i32_0 = arith.constant 0 : i32
    return %c0_i32 : i32
  }
  func.func @transform_1(%arg0: i32) -> (i32, i32) {
    %c0_i32 = arith.constant 0 : i32
    %c0_i32_0 = arith.constant 0 : i32
    return %c0_i32, %arg0 : i32, i32
  }
  func.func @transform_2(%arg0: i32) -> (i32, i32) {
    %c0_i32 = arith.constant 0 : i32
    %c0_i32_0 = arith.constant 0 : i32
    %c0_i32_1 = arith.constant 0 : i32
    return %c0_i32, %c0_i32_0 : i32, i32
  }
  func.func @transform_3(%arg0: i32) -> (i32, i32) {
    %c0_i32 = arith.constant 0 : i32
    %c0_i32_0 = arith.constant 0 : i32
    %c0_i32_1 = arith.constant 0 : i32
    return %c0_i32, %c0_i32_0 : i32, i32
  }
  func.func @transform_4(%arg0: i32) -> (i32, i32) {
    %c0_i32 = arith.constant 0 : i32
    %c0_i32_0 = arith.constant 0 : i32
    return %c0_i32, %arg0 : i32, i32
  }
}

</mosaic_0001>

<llo_original>
// kernel: tpu_custom_call.1
$region0: #{tpu_custom_call.1}
  #allocation0 [shape = 'u32[]', space=smem, size = 0x4, offset = 0x4, fixed_abs, tag = 'smem constant byte address 0x4 - core index']
  #allocation1 [shape = 'u32[72,128]{1,0:T(1,128)}', space=vmem, size = 0x9000, scoped, tag = 'internal scratch']
  #allocation2 [shape = 'f32[1]{0:T(128)S(6)}', space=smem, size = 0x200, scoped, tag = 'scoped memory for tpu_custom_call.1']
  %s0 = inlined_call_operand.<no memory space> [shape: f32[1], index: 0, kind: input, shape index: {}]
  %s1 = inlined_call_operand.hbm [shape: f32[128,512], index: 1, kind: input, shape index: {}]
  %s2 = inlined_call_operand.vmem [shape: f32[16,128], index: 2, kind: input, shape index: {}]
  %s3 = inlined_call_operand.vmem [shape: f32[16,1], index: 3, kind: input, shape index: {}]
  %s4 = inlined_call_operand.hbm [shape: f32[16,512], index: 4, kind: output, shape index: {}]
  %s5 = sld [smem:[#allocation0]]
  $region53: #{tpu_custom_call.1} parent=0
    _
  %s7 = ssub.s32 1, %s5
  %s8 = scalar_select 0, %s7, %s5
  %9 = sst [smem:[#allocation2]] %s0
  $region1: #{tpu_custom_call.1} parent=0
    #allocation3 [shape = 'u8[262144]{0}', space=vmem, size = 0x40000, scoped, tag = 'input window, operand 1']
    #allocation4 [shape = 's32[2]{0}', space=sflag, size = 0x8, scoped, tag = 'scoped memory for tpu_custom_call.1']
    #allocation5 [shape = 's32[2]{0}', space=sflag, size = 0x8, scoped, tag = 'scoped memory for tpu_custom_call.1']
    #allocation6 [shape = 'u8[32768]{0}', space=vmem, size = 0x8000, scoped, tag = 'output window, operand 0']
    %10 = vsyncpa [#allocation4], 0
    %s11 = scalar_lea.sflag [#allocation4], 1
    %12 = vsyncpa %s11, 0
    %13 = vsyncpa [#allocation5], 0
    %s14 = scalar_lea.sflag [#allocation5], 1
    %15 = vsyncpa %s14, 0
    loop: start=0, step=1, limit=4
    $region2: #{tpu_custom_call.1} parent=1 // loop_pre_header
      _
    $region3: #{tpu_custom_call.1} parent=1 // loop_header
      %s17 = sphi 0, %s21
      %p18 = scmp.ge.s32.totalorder %s17, 4
      %s25 = sphi 0, %s25
      %s27 = sphi 0, %s25
      %s28 = sphi 0, %s27
      %s42 = sphi 0, %s28
      %s48 = sphi 0, %s50
      %s51 = sphi 0, %s48
      %s52 = sphi 0, %s51
      %s68 = sphi 0, %s52
      %s72 = sphi 0, %s72
      %s74 = sphi 0, %s72
      %s75 = sphi 0, %s74
      %s89 = sphi 0, %s75
      %s93 = sphi 0, %s93
      %s95 = sphi 0, %s93
      %s96 = sphi 0, %s95
      %s110 = sphi 0, %s96
      %s116 = sphi 0, %s118
      %s119 = sphi 0, %s116
      %s120 = sphi 0, %s119
      %s136 = sphi 0, %s120
    $region4: #{tpu_custom_call.1} parent=1 // loop_header_branch
      %20 = sbr.rel (%p18) target = $region8
    $region5: #{tpu_custom_call.1} parent=1 // loop_body
      %s22 = ssub.s32 %s17, 1
      %s23 = ssub.s32 %s17, 2
      %s24 = sadd.s32 %s17, 1
      %s26 = sadd.s32 %s25, 1
      %p29 = scmp.eq.s32.totalorder %s17, 1
      %p30 = scmp.ne.s32.totalorder %s25, %s27
      %p31 = scmp.eq.s32.totalorder %s17, 0
      %p32 = por %p30, %p31
      %p33 = scmp.ne.s32.totalorder %s25, %s27
      %p34 = scmp.eq.s32.totalorder %s22, 1
      %p35 = por %p33, %p34
      %p36 = scmp.ne.s32.totalorder %s27, %s28
      %p37 = scmp.eq.s32.totalorder %s22, 0
      %p38 = por %p36, %p37
      %p39 = scmp.ne.s32.totalorder %s27, %s28
      %p40 = scmp.eq.s32.totalorder %s23, 1
      %p41 = por %p39, %p40
      %p43 = scmp.ne.s32.totalorder %s28, %s42
      %p44 = scmp.eq.s32.totalorder %s23, 0
      %p45 = por %p43, %p44
      %s46 = ssub.s32 %s17, %s24
      %p47 = scmp.eq.s32.totalorder %s46, 0
      %s49 = sadd.s32 %s48, 1
      %s50 = scalar_select %p47, %s48, %s49
      %p53 = pneg %p47
      %p54 = scmp.eq.s32.totalorder %s17, 1
      %p55 = por %p53, %p54
      %p56 = scmp.ne.s32.totalorder %s48, %s51
      %p57 = scmp.eq.s32.totalorder %s17, 0
      %p58 = por %p56, %p57
      %p59 = scmp.ne.s32.totalorder %s48, %s51
      %p60 = scmp.eq.s32.totalorder %s22, 1
      %p61 = por %p59, %p60
      %p62 = scmp.ne.s32.totalorder %s51, %s52
      %p63 = scmp.eq.s32.totalorder %s22, 0
      %p64 = por %p62, %p63
      %p65 = scmp.ne.s32.totalorder %s51, %s52
      %p66 = scmp.eq.s32.totalorder %s23, 1
      %p67 = por %p65, %p66
      %p69 = scmp.ne.s32.totalorder %s52, %s68
      %p70 = scmp.eq.s32.totalorder %s23, 0
      %p71 = por %p69, %p70
      %s73 = sadd.s32 %s72, 1
      %p76 = scmp.eq.s32.totalorder %s17, 1
      %p77 = scmp.ne.s32.totalorder %s72, %s74
      %p78 = scmp.eq.s32.totalorder %s17, 0
      %p79 = por %p77, %p78
      %p80 = scmp.ne.s32.totalorder %s72, %s74
      %p81 = scmp.eq.s32.totalorder %s22, 1
      %p82 = por %p80, %p81
      %p83 = scmp.ne.s32.totalorder %s74, %s75
      %p84 = scmp.eq.s32.totalorder %s22, 0
      %p85 = por %p83, %p84
      %p86 = scmp.ne.s32.totalorder %s74, %s75
      %p87 = scmp.eq.s32.totalorder %s23, 1
      %p88 = por %p86, %p87
      %p90 = scmp.ne.s32.totalorder %s75, %s89
      %p91 = scmp.eq.s32.totalorder %s23, 0
      %p92 = por %p90, %p91
      %s94 = sadd.s32 %s93, 1
      %p97 = scmp.eq.s32.totalorder %s17, 1
      %p98 = scmp.ne.s32.totalorder %s93, %s95
      %p99 = scmp.eq.s32.totalorder %s17, 0
      %p100 = por %p98, %p99
      %p101 = scmp.ne.s32.totalorder %s93, %s95
      %p102 = scmp.eq.s32.totalorder %s22, 1
      %p103 = por %p101, %p102
      %p104 = scmp.ne.s32.totalorder %s95, %s96
      %p105 = scmp.eq.s32.totalorder %s22, 0
      %p106 = por %p104, %p105
      %p107 = scmp.ne.s32.totalorder %s95, %s96
      %p108 = scmp.eq.s32.totalorder %s23, 1
      %p109 = por %p107, %p108
      %p111 = scmp.ne.s32.totalorder %s96, %s110
      %p112 = scmp.eq.s32.totalorder %s23, 0
      %p113 = por %p111, %p112
      %s114 = ssub.s32 %s17, %s24
      %p115 = scmp.eq.s32.totalorder %s114, 0
      %s117 = sadd.s32 %s116, 1
      %s118 = scalar_select %p115, %s116, %s117
      %p121 = pneg %p115
      %p122 = scmp.eq.s32.totalorder %s17, 1
      %p123 = por %p121, %p122
      %p124 = scmp.ne.s32.totalorder %s116, %s119
      %p125 = scmp.eq.s32.totalorder %s17, 0
      %p126 = por %p124, %p125
      %p127 = scmp.ne.s32.totalorder %s116, %s119
      %p128 = scmp.eq.s32.totalorder %s22, 1
      %p129 = por %p127, %p128
      %p130 = scmp.ne.s32.totalorder %s119, %s120
      %p131 = scmp.eq.s32.totalorder %s22, 0
      %p132 = por %p130, %p131
      %p133 = scmp.ne.s32.totalorder %s119, %s120
      %p134 = scmp.eq.s32.totalorder %s23, 1
      %p135 = por %p133, %p134
      %p137 = scmp.ne.s32.totalorder %s120, %s136
      %p138 = scmp.eq.s32.totalorder %s23, 0
      %p139 = por %p137, %p138
      %p140 = scmp.le.s32.totalorder 1, %s17
      %p141 = scmp.lt.s32.totalorder %s17, 3
      %p142 = pnand %p140, %p141
      %p143 = pneg %p142
      // Predicated region
      $region9: #{tpu_custom_call.1} parent=5 // pred_check
        _
      $region10: #{tpu_custom_call.1} parent=5 // pred_check_branch
        %145 = sbr.rel (%p142) target = $region12
      $region11: #{tpu_custom_call.1} parent=5 // pred_region
        %s146 = ssub.s32 %s17, 1
        // Predicated region
        $region13: #{tpu_custom_call.1} parent=11 // pred_check
          %p147 = pneg %p38
        $region14: #{tpu_custom_call.1} parent=11 // pred_check_branch
          %149 = sbr.rel (%p147) target = $region16
        $region15: #{tpu_custom_call.1} parent=11 // pred_region
          _
        $region16: #{tpu_custom_call.1} parent=11 // pred_fallthru
          _
        // Predicated region
        $region17: #{tpu_custom_call.1} parent=11 // pred_check
          %p150 = pneg %p85
        $region18: #{tpu_custom_call.1} parent=11 // pred_check_branch
          %152 = sbr.rel (%p150) target = $region20
        $region19: #{tpu_custom_call.1} parent=11 // pred_region
          _
        $region20: #{tpu_custom_call.1} parent=11 // pred_fallthru
          _
        // Predicated region
        $region21: #{tpu_custom_call.1} parent=11 // pred_check
          %p153 = pneg %p106
        $region22: #{tpu_custom_call.1} parent=11 // pred_check_branch
          %155 = sbr.rel (%p153) target = $region24
        $region23: #{tpu_custom_call.1} parent=11 // pred_region
          _
        $region24: #{tpu_custom_call.1} parent=11 // pred_fallthru
          _
      $region12: #{tpu_custom_call.1} parent=5 // pred_fallthru
        _
      %p156 = scmp.lt.s32.totalorder %s17, 2
      // Predicated region
      $region25: #{tpu_custom_call.1} parent=5 // pred_check
        %p157 = pneg %p156
      $region26: #{tpu_custom_call.1} parent=5 // pred_check_branch
        %159 = sbr.rel (%p157) target = $region28
      $region27: #{tpu_custom_call.1} parent=5 // pred_region
        // Predicated region
        $region29: #{tpu_custom_call.1} parent=27 // pred_check
          %p160 = pneg %p58
        $region30: #{tpu_custom_call.1} parent=27 // pred_check_branch
          %162 = sbr.rel (%p160) target = $region32
        $region31: #{tpu_custom_call.1} parent=27 // pred_region
          %s163 = sand.u32 %s48, 1
          %s164 = scalar_lea.sflag [#allocation4], %s163
          %s165 = sand.u32 %s48, 1
          %s166 = smul.addr %s165, 256
          %s167 = scalar_lea.vmem [#allocation3], %s166
          %s168 = smul.u32 2, %s17
          %170 = vsyncadd %s164, 0
          %s171 = smul.addr %s168, 8
          %s172 = scalar_lea.hbm %s1, %s171
          %s173 = sshll.u32 %s172, 4
          %s174 = int_to_ptr.hbm [resolvable:$true] %s173
          %s175 = sshll.u32 %s167, 4
          %s176 = int_to_ptr.vmem [resolvable:$true] %s175
          %181 = dma.hbm_to_vmem [thread:$0]  %s174, 4096, %s176, %s164, 512, 256, 16
        $region32: #{tpu_custom_call.1} parent=27 // pred_fallthru
          _
      $region28: #{tpu_custom_call.1} parent=5 // pred_fallthru
        _
      %p182 = scmp.le.s32.totalorder 1, %s17
      %p183 = scmp.lt.s32.totalorder %s17, 3
      %p184 = pnand %p182, %p183
      %p185 = pneg %p184
      // Predicated region
      $region33: #{tpu_custom_call.1} parent=5 // pred_check
        _
      $region34: #{tpu_custom_call.1} parent=5 // pred_check_branch
        %187 = sbr.rel (%p184) target = $region36
      $region35: #{tpu_custom_call.1} parent=5 // pred_region
        %s188 = ssub.s32 %s17, 1
        %s189 = sand.u32 %s51, 1
        %s190 = scalar_lea.sflag [#allocation4], %s189
        %s191 = sand.u32 %s51, 1
        %s192 = smul.addr %s191, 256
        %s193 = scalar_lea.vmem [#allocation3], %s192
        // Predicated region
        $region37: #{tpu_custom_call.1} parent=35 // pred_check
          %p194 = pneg %p64
        $region38: #{tpu_custom_call.1} parent=35 // pred_check_branch
          %196 = sbr.rel (%p194) target = $region40
        $region39: #{tpu_custom_call.1} parent=35 // pred_region
          %198 = dma.done %s190, 4096
        $region40: #{tpu_custom_call.1} parent=35 // pred_fallthru
          _
        %p199 = pneg %p38
        %p200 = pneg %p35
        %s201 = sand.u32 %s51, 1
        %s202 = scalar_lea.sflag [#allocation4], %s201
        %s203 = sand.u32 %s51, 1
        %s204 = smul.addr %s203, 256
        %s205 = scalar_lea.vmem [#allocation3], %s204
        %p206 = pneg %p64
        %p207 = pneg %p61
        %p208 = pneg %p85
        %p209 = pneg %p82
        %p210 = pneg %p106
        %p211 = pneg %p103
        %p212 = pneg %p132
        %p213 = pneg %p129
        %s214 = sand.u32 %s119, 1
        %s215 = scalar_lea.sflag [#allocation5], %s214
        %s216 = sand.u32 %s119, 1
        %s217 = smul.addr %s216, 32
        %s218 = scalar_lea.vmem [#allocation6], %s217
        %s219 = smul.u32 2, %s22
        %s220 = smul.u32 2, %s22
        %v221 = vld [vmem:[%s2] sm:$0xff]
        %v222 = vld [vmem:[%s2 + $0x8] sm:$0xff]
        %v223 = vld [vmem:[%s193] sm:$0xff]
        %v224 = vld [vmem:[%s193 + $0x8] sm:$0xff]
        %v225 = vld [vmem:[%s193 + $0x10] sm:$0xff]
        %v226 = vld [vmem:[%s193 + $0x18] sm:$0xff]
        %v227 = vld [vmem:[%s193 + $0x20] sm:$0xff]
        %v228 = vld [vmem:[%s193 + $0x28] sm:$0xff]
        %v229 = vld [vmem:[%s193 + $0x30] sm:$0xff]
        %v230 = vld [vmem:[%s193 + $0x38] sm:$0xff]
        %v231 = vld [vmem:[%s193 + $0x40] sm:$0xff]
        %v232 = vld [vmem:[%s193 + $0x48] sm:$0xff]
        %v233 = vld [vmem:[%s193 + $0x50] sm:$0xff]
        %v234 = vld [vmem:[%s193 + $0x58] sm:$0xff]
        %v235 = vld [vmem:[%s193 + $0x60] sm:$0xff]
        %v236 = vld [vmem:[%s193 + $0x68] sm:$0xff]
        %v237 = vld [vmem:[%s193 + $0x70] sm:$0xff]
        %v238 = vld [vmem:[%s193 + $0x78] sm:$0xff]
        %v239 = vld [vmem:[%s193 + $0x80] sm:$0xff]
        %v240 = vld [vmem:[%s193 + $0x88] sm:$0xff]
        %v241 = vld [vmem:[%s193 + $0x90] sm:$0xff]
        %v242 = vld [vmem:[%s193 + $0x98] sm:$0xff]
        %v243 = vld [vmem:[%s193 + $0xa0] sm:$0xff]
        %v244 = vld [vmem:[%s193 + $0xa8] sm:$0xff]
        %v245 = vld [vmem:[%s193 + $0xb0] sm:$0xff]
        %v246 = vld [vmem:[%s193 + $0xb8] sm:$0xff]
        %v247 = vld [vmem:[%s193 + $0xc0] sm:$0xff]
        %v248 = vld [vmem:[%s193 + $0xc8] sm:$0xff]
        %v249 = vld [vmem:[%s193 + $0xd0] sm:$0xff]
        %v250 = vld [vmem:[%s193 + $0xd8] sm:$0xff]
        %v251 = vld [vmem:[%s193 + $0xe0] sm:$0xff]
        %v252 = vld [vmem:[%s193 + $0xe8] sm:$0xff]
        %v253 = vld [vmem:[%s193 + $0xf0] sm:$0xff]
        %v254 = vld [vmem:[%s193 + $0xf8] sm:$0xff]
        %v255 = vld [vmem:[%s3] sm:$0xff]
        %v256 = vld [vmem:[%s3 + $0x8] sm:$0xff]
        %258 = vset.pattern.permute.xlu0 0
        %259 = vperm.xlu0 %258, %v255
        %v260 = vpop.permute.xlu0 %259
        %263 = vset.pattern.permute.xlu0 0
        %264 = vperm.xlu0 %263, %v256
        %v265 = vpop.permute.xlu0 %264
        %267 = vmatpush.msra.mxu0 %v253
        %268 = vmatpush.msra.mxu0 %v251
        %269 = vmatpush.msra.mxu0 %v249
        %270 = vmatpush.msra.mxu0 %v247
        %271 = vmatpush.msra.mxu0 %v245
        %272 = vmatpush.msra.mxu0 %v243
        %273 = vmatpush.msra.mxu0 %v241
        %274 = vmatpush.msra.mxu0 %v239
        %275 = vmatpush.msra.mxu0 %v237
        %276 = vmatpush.msra.mxu0 %v235
        %277 = vmatpush.msra.mxu0 %v233
        %278 = vmatpush.msra.mxu0 %v231
        %279 = vmatpush.msra.mxu0 %v229
        %280 = vmatpush.msra.mxu0 %v227
        %281 = vmatpush.msra.mxu0 %v225
        %282 = vmatpush.msra.mxu0 %v223
        %283 = vmatmul.f32.gmra.mxu0 %v221
        %v284 = vpop.f32.mrf.mxu0
        %v285 = vadd.f32 %v260, %v284
        %286 = vmatmul.f32.gmra.mxu0 %v222
        %v287 = vpop.f32.mrf.mxu0
        %v288 = vadd.f32 %v265, %v287
        %289 = vdwg.mxu0
        %290 = vmatpush.msra.mxu0 %v254
        %291 = vmatpush.msra.mxu0 %v252
        %292 = vmatpush.msra.mxu0 %v250
        %293 = vmatpush.msra.mxu0 %v248
        %294 = vmatpush.msra.mxu0 %v246
        %295 = vmatpush.msra.mxu0 %v244
        %296 = vmatpush.msra.mxu0 %v242
        %297 = vmatpush.msra.mxu0 %v240
        %298 = vmatpush.msra.mxu0 %v238
        %299 = vmatpush.msra.mxu0 %v236
        %300 = vmatpush.msra.mxu0 %v234
        %301 = vmatpush.msra.mxu0 %v232
        %302 = vmatpush.msra.mxu0 %v230
        %303 = vmatpush.msra.mxu0 %v228
        %304 = vmatpush.msra.mxu0 %v226
        %305 = vmatpush.msra.mxu0 %v224
        %306 = vmatmul.f32.gmra.mxu0 %v221
        %v307 = vpop.f32.mrf.mxu0
        %v308 = vadd.f32 %v260, %v307
        %309 = vmatmul.f32.gmra.mxu0 %v222
        %v310 = vpop.f32.mrf.mxu0
        %v311 = vadd.f32 %v265, %v310
        %312 = vdwg.mxu0
        %v313 = vmax.f32 %v285, 0.0
        %v314 = vmax.f32 %v308, 0.0
        %v315 = vmax.f32 %v288, 0.0
        %v316 = vmax.f32 %v311, 0.0
        %317 = vst [vmem:[%s218] sm:$0xff] %v313
        %318 = vst [vmem:[%s218 + $0x8] sm:$0xff] %v314
        %319 = vst [vmem:[%s218 + $0x10] sm:$0xff] %v315
        %320 = vst [vmem:[%s218 + $0x18] sm:$0xff] %v316
        %s321 = sand.u32 %s119, 1
        %s322 = scalar_lea.sflag [#allocation5], %s321
        %s323 = sand.u32 %s119, 1
        %s324 = smul.addr %s323, 32
        %s325 = scalar_lea.vmem [#allocation6], %s324
        // Predicated region
        $region41: #{tpu_custom_call.1} parent=35 // pred_check
          %p326 = pneg %p129
        $region42: #{tpu_custom_call.1} parent=35 // pred_check_branch
          %328 = sbr.rel (%p326) target = $region44
        $region43: #{tpu_custom_call.1} parent=35 // pred_region
          %s329 = smul.u32 2, %s22
          %331 = vsyncadd %s322, 0
          %s332 = smul.addr %s329, 8
          %s333 = scalar_lea.hbm %s4, %s332
          %s334 = sshll.u32 %s325, 4
          %s335 = int_to_ptr.vmem [resolvable:$true] %s334
          %s336 = sshll.u32 %s333, 4
          %s337 = int_to_ptr.hbm [resolvable:$true] %s336
          %342 = dma.vmem_to_hbm [thread:$0]  %s335, 512, %s337, %s322, 256, 512, 16
        $region44: #{tpu_custom_call.1} parent=35 // pred_fallthru
          _
      $region36: #{tpu_custom_call.1} parent=5 // pred_fallthru
        _
      %p343 = scmp.le.s32.totalorder 2, %s17
      // Predicated region
      $region45: #{tpu_custom_call.1} parent=5 // pred_check
        %p344 = pneg %p343
      $region46: #{tpu_custom_call.1} parent=5 // pred_check_branch
        %346 = sbr.rel (%p344) target = $region48
      $region47: #{tpu_custom_call.1} parent=5 // pred_region
        %s347 = ssub.s32 %s17, 2
        // Predicated region
        $region49: #{tpu_custom_call.1} parent=47 // pred_check
          %p348 = pneg %p135
        $region50: #{tpu_custom_call.1} parent=47 // pred_check_branch
          %350 = sbr.rel (%p348) target = $region52
        $region51: #{tpu_custom_call.1} parent=47 // pred_region
          %s351 = sand.u32 %s120, 1
          %s352 = scalar_lea.sflag [#allocation5], %s351
          %s353 = sand.u32 %s120, 1
          %s354 = smul.addr %s353, 32
          %s355 = scalar_lea.vmem [#allocation6], %s354
          %357 = dma.done %s352, 512
        $region52: #{tpu_custom_call.1} parent=47 // pred_fallthru
          _
      $region48: #{tpu_custom_call.1} parent=5 // pred_fallthru
        _
    $region6: #{tpu_custom_call.1} parent=1 // loop_footer
      %s21 = sadd.s32 1, %s17
    $region7: #{tpu_custom_call.1} parent=1 // loop_footer_branch
      %16 = sbr.rel target = $region3
    $region8: #{tpu_custom_call.1} parent=1 // loop_exit
      _
    %358 = vsyncpa [#allocation4], 1
    %s359 = scalar_lea.sflag [#allocation4], 1
    %360 = vsyncpa %s359, 1
    %361 = vsyncpa [#allocation5], 1
    %s362 = scalar_lea.sflag [#allocation5], 1
    %363 = vsyncpa %s362, 1

</llo_original>
